<compile_context>
chip_gen: v6e
topology: v6e:2x2x1
jax: 0.10.0
libtpu: 0.0.40
codegen_flags: <defaults>
</compile_context>

<pallas_src>
import functools

import jax
import jax.numpy as jnp
from jax import lax
from jax.experimental import pallas as pl
from jax.experimental.pallas import tpu as pltpu


def _round_up(x: int, m: int) -> int:
    return ((x + m - 1) // m) * m


def _vmem_budget_bytes() -> int:
    """Generation-aware VMEM budget (also used as vmem_limit_bytes)."""
    try:
        cap = int(pltpu.get_tpu_info().vmem_capacity_bytes)
    except Exception:
        cap = 64 * 1024 * 1024          # conservative fallback (v7x-sized)
    # ~55% of physical VMEM, never above 64 MiB:
    #   v7x (64 MiB / TC)  -> ~35 MiB,   v5e/v6e (128 MiB) -> 64 MiB.
    budget = min(cap * 55 // 100, 64 * 1024 * 1024)
    return (budget // (1 << 20)) * (1 << 20)


def _choose_tiles(n: int, dp: int, op_bytes: int, vmem_budget: int):
    """Pick (tm, tn, n_padded) for the (rows x cols) similarity sweep."""
    n8 = _round_up(max(n, 8), 8)

    # Column tile: grow while the double-buffered (tn, dp) block fits ~1/3 of
    # the budget.  Fat when Dp is small (amortizes per-step overhead), thin
    # when Dp is large (v7x 64 MiB VMEM).
    tn = 8
    while (tn < 2048 and tn * 2 <= n8
           and 2 * (tn * 2) * dp * op_bytes <= vmem_budget // 3):
        tn *= 2

    # Row tile: up to 512 (fewer full passes over the column stream; matters
    # most on v5e/v6e HBM), capped at n8 // 2 for larger problems so the
    # 'parallel' row axis gives both v7x TensorCores work.
    tm_cap = n8 // 2 if n8 >= 256 else n8
    tm = 8
    while (tm < 512 and tm * 2 <= tm_cap
           and 2 * (tm * 2) * dp * op_bytes <= vmem_budget // 4):
        tm *= 2

    # Keep the (tm, tn) f32 similarity / exp / mask temporaries in VMEM.
    while max(tm, tn) > 8 and tm * tn * 24 > vmem_budget // 3:
        if tn >= tm:
            tn //= 2
        else:
            tm //= 2

    # Bound the pad-and-mask overhead to ~25% of the (8-aligned) row count.
    while max(tm, tn) > 8 and (_round_up(n8, max(tm, tn)) - n8) * 4 > n8:
        if tn >= tm:
            tn //= 2
        else:
            tm //= 2

    n_padded = _round_up(n8, max(tm, tn))
    return tm, tn, n_padded


def _simclr_kernel(frow_ref, fcol_ref, out_ref, denom_acc, pos_acc, *,
                   inv_temp: float, tm: int, tn: int, acc_w: int,
                   half: int, n_valid: int, mask_pad_cols: bool):
    i = pl.program_id(0)            # row tile (parallel)
    j = pl.program_id(1)            # col tile (reduction axis, last)
    nj = pl.num_programs(1)
    row_start = i * tm
    col_start = j * tn

    @pl.when(j == 0)
    def _init():
        denom_acc[...] = jnp.zeros_like(denom_acc)
        pos_acc[...] = jnp.zeros_like(pos_acc)

    frow = frow_ref[...]            # (tm, Dp)
    fcol = fcol_ref[...]            # (tn, Dp)

    # Similarity tile: contract on the shared (padded) feature axis, f32 acc.
    dims = (((1,), (1,)), ((), ()))
    if frow.dtype == jnp.float32:
        # inv_temp hoisted onto the (tm, Dp) operand instead of every (tm, tn) tile.
        s = lax.dot_general(frow * jnp.float32(inv_temp), fcol, dims,
                            preferred_element_type=jnp.float32)
    else:
        # Keep bf16 operands for the MXU; scale the f32 result.
        s = lax.dot_general(frow, fcol, dims,
                            preferred_element_type=jnp.float32) * inv_temp
    e = jnp.exp(s)                  # (tm, tn) f32 — EUP is the hot unit

    def lane_accumulate(x):
        # VPU adds of 128-lane groups into the lane-wide accumulator; the one
        # cross-lane (XLU) reduce happens in the finalize step.
        for g in range(tn // acc_w):
            denom_acc[...] += x[:, g * acc_w:(g + 1) * acc_w]

    # Only tiles the global diagonal (or the padded-column region) crosses pay
    # for the iota mask; everything else takes the unmasked fast path.
    diag_hit = jnp.logical_and(row_start < col_start + tn,
                               col_start < row_start + tm)
    need_mask = diag_hit
    if mask_pad_cols:
        need_mask = jnp.logical_or(need_mask, col_start + tn > n_valid)

    @pl.when(need_mask)
    def _masked():
        r_ids = row_start + lax.broadcasted_iota(jnp.int32, (tm, tn), 0)
        c_ids = col_start + lax.broadcasted_iota(jnp.int32, (tm, tn), 1)
        drop = r_ids == c_ids
        if mask_pad_cols:
            drop = jnp.logical_or(drop, c_ids >= n_valid)
        lane_accumulate(jnp.where(drop, 0.0, e))

    @pl.when(jnp.logical_not(need_mask))
    def _unmasked():
        lane_accumulate(e)

    # Positive-pair similarity extracted from the s tile (no partner stream):
    # row r's positive column is (r + half) mod n.  Gate on a scalar check of
    # whether this column tile can contain any of this row tile's positives.
    row_end = row_start + tm
    col_end = col_start + tn
    a_lo = row_start + half                               # rows <  half
    a_hi = jnp.minimum(row_end, half) + half
    b_lo = jnp.maximum(row_start, half) - half            # rows >= half
    b_hi = row_end - half
    pos_hit = jnp.logical_or(
        jnp.logical_and(a_lo < a_hi,
                        jnp.logical_and(a_lo < col_end, col_start < a_hi)),
        jnp.logical_and(b_lo < b_hi,
                        jnp.logical_and(b_lo < col_end, col_start < b_hi)))

    @pl.when(pos_hit)
    def _pos():
        r_ids = row_start + lax.broadcasted_iota(jnp.int32, (tm, tn), 0)
        c_ids = col_start + lax.broadcasted_iota(jnp.int32, (tm, tn), 1)
        p_col = jnp.where(r_ids < half, r_ids + half, r_ids - half)
        pos_acc[...] += jnp.sum(jnp.where(c_ids == p_col, s, 0.0),
                                axis=1, keepdims=True)

    @pl.when(j == nj - 1)
    def _finalize():
        denom = jnp.sum(denom_acc[...], axis=1, keepdims=True)   # (tm, 1)
        out_ref[...] = jnp.log(denom + 1e-7) - pos_acc[...]


def simclr_loss(z1: jax.Array, z2: jax.Array, temperature: float = 0.07, *,
                mxu_dtype=jnp.bfloat16) -> jax.Array:
    """NT-Xent SimCLR loss via a tiled Pallas TPU kernel. Returns scalar f32.

    `mxu_dtype` controls only the matmul operand dtype (HBM/VMEM/MXU); all
    exp / accumulation / log math stays float32.  Use float32 for exact parity
    with the reference; bfloat16 (default) halves HBM traffic and MXU time.
    """
    assert z1.shape == z2.shape and z1.ndim == 2
    b, d = z1.shape
    n = 2 * b
    inv_temp = 1.0 / float(temperature)

    # Lane-pad the feature axis; zero columns change no dot product.
    dp = _round_up(max(d, 1), 128)
    feats = jnp.concatenate([z1, z2], axis=0)
    if dp != d:
        feats = jnp.pad(feats, ((0, 0), (0, dp - d)))

    op_dtype = jnp.dtype(mxu_dtype)
    op_bytes = op_dtype.itemsize
    feats = feats.astype(op_dtype)

    budget = _vmem_budget_bytes()
    tm, tn, n_padded = _choose_tiles(n, dp, op_bytes, budget)
    if n_padded != n:
        # Pad-and-mask: padded columns are zeroed inside the kernel; padded
        # rows are dropped from the wrapper-side sum.
        feats = jnp.pad(feats, ((0, n_padded - n), (0, 0)))
    acc_w = min(tn, 128)

    kernel = functools.partial(
        _simclr_kernel, inv_temp=inv_temp, tm=tm, tn=tn, acc_w=acc_w,
        half=b, n_valid=n, mask_pad_cols=(n_padded != n))

    cost = pl.CostEstimate(
        flops=2 * n_padded * n_padded * dp,
        transcendentals=n_padded * n_padded,
        bytes_accessed=((n_padded // tm) * n_padded * dp * op_bytes
                        + n_padded * dp * op_bytes + n_padded * 4))

    per_row = pl.pallas_call(
        kernel,
        out_shape=jax.ShapeDtypeStruct((n_padded, 1), jnp.float32),
        grid_spec=pltpu.PrefetchScalarGridSpec(
            num_scalar_prefetch=0,
            grid=(n_padded // tm, n_padded // tn),
            in_specs=[
                pl.BlockSpec((tm, dp), lambda i, j: (i, 0)),   # row block
                pl.BlockSpec((tn, dp), lambda i, j: (j, 0)),   # column block
            ],
            out_specs=pl.BlockSpec((tm, 1), lambda i, j: (i, 0)),
            scratch_shapes=[
                pltpu.VMEM((tm, acc_w), jnp.float32),   # lane-wide denominator
                pltpu.VMEM((tm, 1), jnp.float32),       # positive-pair sim
            ],
        ),
        compiler_params=pltpu.CompilerParams(
            dimension_semantics=("parallel", "arbitrary"),
            vmem_limit_bytes=budget,
        ),
        cost_estimate=cost,
    )(feats, feats)

    return jnp.sum(per_row[:n, 0]) / jnp.float32(n)


def _simclr_loss_ref(z1, z2, temperature=0.07):
    """Pure-JAX reference mirroring the PyTorch forward (live path) exactly."""
    b = z1.shape[0]
    f = jnp.concatenate([z1, z2], axis=0).astype(jnp.float32)
    n = 2 * b
    sim = (f @ f.T) / temperature
    exp_sim = jnp.exp(sim) * (1.0 - jnp.eye(n, dtype=jnp.float32))
    log_prob = sim - jnp.log(jnp.sum(exp_sim, axis=1, keepdims=True) + 1e-7)
    pos = jnp.zeros((n, n), jnp.float32)
    pos = pos.at[:b, b:].set(jnp.eye(b))
    pos = pos.at[b:, :b].set(jnp.eye(b))
    return -jnp.sum(pos * log_prob) / n


if __name__ == "__main__":
    key = jax.random.PRNGKey(0)

    def make_pair(k, b, d):
        k1, k2 = jax.random.split(k)
        z1 = jax.random.normal(k1, (b, d), dtype=jnp.float32)
        z2 = jax.random.normal(k2, (b, d), dtype=jnp.float32)
        # Standard SimCLR usage: L2-normalized projections (keeps exp(sim/T)
        # finite at T = 0.07, matching the reference's unstabilized math).
        z1 = z1 / jnp.linalg.norm(z1, axis=1, keepdims=True)
        z2 = z2 / jnp.linalg.norm(z2, axis=1, keepdims=True)
        return z1, z2

    # (4, 32): single tile.  (24, 96): multi-tile grid (diag / positive pairs
    # span tiles).  (13, 40): n = 26 exercises the pad-and-mask path.
    cases = [(4, 32), (24, 96), (13, 40)]
    keys = jax.random.split(key, len(cases))

    for idx, ((b, d), k) in enumerate(zip(cases, keys)):
        z1, z2 = make_pair(k, b, d)

        # f32 MXU path: parity with the reference math.
        loss32 = jax.block_until_ready(
            simclr_loss(z1, z2, 0.07, mxu_dtype=jnp.float32))
        ref32 = jax.block_until_ready(_simclr_loss_ref(z1, z2, 0.07))
        assert jnp.isfinite(loss32), (b, d, loss32)
        assert jnp.allclose(loss32, ref32, rtol=1e-4, atol=1e-4), \
            (b, d, float(loss32), float(ref32))

        # Default bf16-operand path (compare against the same math applied to
        # bf16-rounded features); run once to limit compile count.
        if idx == 0:
            loss16 = jax.block_until_ready(simclr_loss(z1, z2, 0.07))
            z1r = z1.astype(jnp.bfloat16).astype(jnp.float32)
            z2r = z2.astype(jnp.bfloat16).astype(jnp.float32)
            ref16 = jax.block_until_ready(_simclr_loss_ref(z1r, z2r, 0.07))
            assert jnp.isfinite(loss16), (b, d, loss16)
            assert jnp.allclose(loss16, ref16, rtol=1e-3, atol=1e-3), \
                (b, d, float(loss16), float(ref16))

    print("KERNEL_OK")
</pallas_src>

<mosaic_0001>
module attributes {stable_mosaic.version = 11 : i64} {
  func.func @_simclr_kernel(%arg0: i32, %arg1: i32, %arg2: memref<8x128xf32, #tpu.memory_space<vmem>>, %arg3: memref<8x128xf32, #tpu.memory_space<vmem>>, %arg4: memref<8x1xf32, #tpu.memory_space<vmem>>, %arg5: memref<8x8xf32, #tpu.memory_space<vmem>>, %arg6: memref<8x1xf32, #tpu.memory_space<vmem>>) attributes {dimension_semantics = [#tpu.dimension_semantics<parallel>, #tpu.dimension_semantics<arbitrary>], iteration_bounds = array<i64: 1, 1>, scalar_prefetch = 0 : i64, scratch_operands = 2 : i64, tpu.core_type = #tpu.core_type<tc>, window_params = [{transform_indices = @transform_0, window_bounds = array<i64: 8, 128>}, {transform_indices = @transform_1, window_bounds = array<i64: 8, 128>}, {transform_indices = @transform_2, window_bounds = array<i64: 8, 1>}]} {
    %c8_i32 = arith.constant 8 : i32
    %0 = arith.muli %arg0, %c8_i32 : i32
    %c8_i32_0 = arith.constant 8 : i32
    %1 = arith.muli %arg1, %c8_i32_0 : i32
    %c0_i32 = arith.constant 0 : i32
    %2 = arith.cmpi eq, %arg1, %c0_i32 : i32
    %3 = arith.extui %2 : i1 to i32
    %c0_i32_1 = arith.constant 0 : i32
    %4 = arith.cmpi ne, %3, %c0_i32_1 : i32
    scf.if %4 {
      %cst_20 = arith.constant 0.000000e+00 : f32
      %45 = vector.broadcast %cst_20 : f32 to vector<8x8xf32>
      %c0_21 = arith.constant 0 : index
      %c0_22 = arith.constant 0 : index
      %46 = vector.load %arg5[%c0_21, %c0_22] : memref<8x8xf32, #tpu.memory_space<vmem>>, vector<8x8xf32>
      tpu.vector_store %arg5[%c0_21, %c0_22], %45 {strides = array<i32>} : memref<8x8xf32, #tpu.memory_space<vmem>>, vector<8x8xf32>,
      %cst_23 = arith.constant 0.000000e+00 : f32
      %47 = vector.broadcast %cst_23 : f32 to vector<8x1xf32>
      %c0_24 = arith.constant 0 : index
      %c0_25 = arith.constant 0 : index
      %48 = vector.load %arg6[%c0_24, %c0_25] : memref<8x1xf32, #tpu.memory_space<vmem>>, vector<8x1xf32>
      tpu.vector_store %arg6[%c0_24, %c0_25], %47 {strides = array<i32>} : memref<8x1xf32, #tpu.memory_space<vmem>>, vector<8x1xf32>,
    } else {
    }
    %c0 = arith.constant 0 : index
    %c0_2 = arith.constant 0 : index
    %5 = vector.load %arg2[%c0, %c0_2] : memref<8x128xf32, #tpu.memory_space<vmem>>, vector<8x128xf32>
    %c0_3 = arith.constant 0 : index
    %c0_4 = arith.constant 0 : index
    %6 = vector.load %arg3[%c0_3, %c0_4] : memref<8x128xf32, #tpu.memory_space<vmem>>, vector<8x128xf32>
    %cst = arith.constant 14.2857141 : f32
    %7 = vector.broadcast %cst : f32 to vector<8x128xf32>
    %8 = arith.mulf %5, %7 : vector<8x128xf32>
    %cst_5 = arith.constant dense<0.000000e+00> : vector<8x8xf32>
    %9 = tpu.matmul %8, %6, %cst_5 {dimension_numbers = #tpu.dot_dimension_numbers<[1], [1], [0], [0], [0, 0, 1, 0], [], []>} : vector<8x128xf32>, vector<8x128xf32>, vector<8x8xf32> -> vector<8x8xf32>
    %10 = math.exp %9 : vector<8x8xf32>
    %c8_i32_6 = arith.constant 8 : i32
    %11 = arith.addi %1, %c8_i32_6 : i32
    %12 = arith.cmpi slt, %0, %11 : i32
    %c8_i32_7 = arith.constant 8 : i32
    %13 = arith.addi %0, %c8_i32_7 : i32
    %14 = arith.cmpi slt, %1, %13 : i32
    %15 = arith.andi %12, %14 : i1
    %16 = arith.extui %15 : i1 to i32
    %c0_i32_8 = arith.constant 0 : i32
    %17 = arith.cmpi ne, %16, %c0_i32_8 : i32
    scf.if %17 {
      %45 = tpu.iota {dimensions = array<i32: 0>} : vector<8x8xi32>
      %46 = vector.broadcast %0 : i32 to vector<8x8xi32>
      %47 = arith.addi %46, %45 : vector<8x8xi32>
      %48 = tpu.iota {dimensions = array<i32: 1>} : vector<8x8xi32>
      %49 = vector.broadcast %1 : i32 to vector<8x8xi32>
      %50 = arith.addi %49, %48 : vector<8x8xi32>
      %51 = arith.cmpi eq, %47, %50 : vector<8x8xi32>
      %cst_20 = arith.constant 0.000000e+00 : f32
      %52 = vector.broadcast %cst_20 : f32 to vector<8x8xf32>
      %53 = arith.select %51, %52, %10 : vector<8x8xi1>, vector<8x8xf32>
      %c0_21 = arith.constant 0 : index
      %c0_22 = arith.constant 0 : index
      %54 = vector.load %arg5[%c0_21, %c0_22] : memref<8x8xf32, #tpu.memory_space<vmem>>, vector<8x8xf32>
      %55 = arith.addf %54, %53 : vector<8x8xf32>
      %c0_23 = arith.constant 0 : index
      %c0_24 = arith.constant 0 : index
      %56 = vector.load %arg5[%c0_23, %c0_24] : memref<8x8xf32, #tpu.memory_space<vmem>>, vector<8x8xf32>
      tpu.vector_store %arg5[%c0_23, %c0_24], %55 {strides = array<i32>} : memref<8x8xf32, #tpu.memory_space<vmem>>, vector<8x8xf32>,
    } else {
    }
    %true = arith.constant true
    %18 = arith.xori %15, %true : i1
    %19 = arith.extui %18 : i1 to i32
    %c0_i32_9 = arith.constant 0 : i32
    %20 = arith.cmpi ne, %19, %c0_i32_9 : i32
    scf.if %20 {
      %c0_20 = arith.constant 0 : index
      %c0_21 = arith.constant 0 : index
      %45 = vector.load %arg5[%c0_20, %c0_21] : memref<8x8xf32, #tpu.memory_space<vmem>>, vector<8x8xf32>
      %46 = arith.addf %45, %10 : vector<8x8xf32>
      %c0_22 = arith.constant 0 : index
      %c0_23 = arith.constant 0 : index
      %47 = vector.load %arg5[%c0_22, %c0_23] : memref<8x8xf32, #tpu.memory_space<vmem>>, vector<8x8xf32>
      tpu.vector_store %arg5[%c0_22, %c0_23], %46 {strides = array<i32>} : memref<8x8xf32, #tpu.memory_space<vmem>>, vector<8x8xf32>,
    } else {
    }
    %c8_i32_10 = arith.constant 8 : i32
    %21 = arith.addi %0, %c8_i32_10 : i32
    %c8_i32_11 = arith.constant 8 : i32
    %22 = arith.addi %1, %c8_i32_11 : i32
    %c4_i32 = arith.constant 4 : i32
    %23 = arith.addi %0, %c4_i32 : i32
    %c4_i32_12 = arith.constant 4 : i32
    %24 = arith.minsi %21, %c4_i32_12 : i32
    %c4_i32_13 = arith.constant 4 : i32
    %25 = arith.addi %24, %c4_i32_13 : i32
    %c4_i32_14 = arith.constant 4 : i32
    %26 = arith.maxsi %0, %c4_i32_14 : i32
    %c4_i32_15 = arith.constant 4 : i32
    %27 = arith.subi %26, %c4_i32_15 : i32
    %c4_i32_16 = arith.constant 4 : i32
    %28 = arith.subi %21, %c4_i32_16 : i32
    %29 = arith.cmpi slt, %23, %25 : i32
    %30 = arith.cmpi slt, %23, %22 : i32
    %31 = arith.cmpi slt, %1, %25 : i32
    %32 = arith.andi %30, %31 : i1
    %33 = arith.andi %29, %32 : i1
    %34 = arith.cmpi slt, %27, %28 : i32
    %35 = arith.cmpi slt, %27, %22 : i32
    %36 = arith.cmpi slt, %1, %28 : i32
    %37 = arith.andi %35, %36 : i1
    %38 = arith.andi %34, %37 : i1
    %39 = arith.ori %33, %38 : i1
    %40 = arith.extui %39 : i1 to i32
    %c0_i32_17 = arith.constant 0 : i32
    %41 = arith.cmpi ne, %40, %c0_i32_17 : i32
    scf.if %41 {
      %45 = tpu.iota {dimensions = array<i32: 0>} : vector<8x8xi32>
      %46 = vector.broadcast %0 : i32 to vector<8x8xi32>
      %47 = arith.addi %46, %45 : vector<8x8xi32>
      %48 = tpu.iota {dimensions = array<i32: 1>} : vector<8x8xi32>
      %49 = vector.broadcast %1 : i32 to vector<8x8xi32>
      %50 = arith.addi %49, %48 : vector<8x8xi32>
      %c4_i32_20 = arith.constant 4 : i32
      %51 = vector.broadcast %c4_i32_20 : i32 to vector<8x8xi32>
      %52 = arith.cmpi slt, %47, %51 : vector<8x8xi32>
      %c4_i32_21 = arith.constant 4 : i32
      %53 = vector.broadcast %c4_i32_21 : i32 to vector<8x8xi32>
      %54 = arith.addi %47, %53 : vector<8x8xi32>
      %c4_i32_22 = arith.constant 4 : i32
      %55 = vector.broadcast %c4_i32_22 : i32 to vector<8x8xi32>
      %56 = arith.subi %47, %55 : vector<8x8xi32>
      %57 = arith.select %52, %54, %56 : vector<8x8xi1>, vector<8x8xi32>
      %c0_23 = arith.constant 0 : index
      %c0_24 = arith.constant 0 : index
      %58 = vector.load %arg6[%c0_23, %c0_24] : memref<8x1xf32, #tpu.memory_space<vmem>>, vector<8x1xf32>
      %59 = arith.cmpi eq, %50, %57 : vector<8x8xi32>
      %cst_25 = arith.constant 0.000000e+00 : f32
      %60 = vector.broadcast %cst_25 : f32 to vector<8x8xf32>
      %61 = arith.select %59, %9, %60 : vector<8x8xi1>, vector<8x8xf32>
      %cst_26 = arith.constant dense<0.000000e+00> : vector<8xf32>
      %62 = vector.multi_reduction <add>, %61, %cst_26 [1] : vector<8x8xf32> to vector<8xf32>
      %63 = vector.shape_cast %62 : vector<8xf32> to vector<8x1xf32>
      %64 = arith.addf %58, %63 : vector<8x1xf32>
      %c0_27 = arith.constant 0 : index
      %c0_28 = arith.constant 0 : index
      %65 = vector.load %arg6[%c0_27, %c0_28] : memref<8x1xf32, #tpu.memory_space<vmem>>, vector<8x1xf32>
      tpu.vector_store %arg6[%c0_27, %c0_28], %64 {strides = array<i32>} : memref<8x1xf32, #tpu.memory_space<vmem>>, vector<8x1xf32>,
    } else {
    }
    %c0_i32_18 = arith.constant 0 : i32
    %42 = arith.cmpi eq, %arg1, %c0_i32_18 : i32
    %43 = arith.extui %42 : i1 to i32
    %c0_i32_19 = arith.constant 0 : i32
    %44 = arith.cmpi ne, %43, %c0_i32_19 : i32
    scf.if %44 {
      %c0_20 = arith.constant 0 : index
      %c0_21 = arith.constant 0 : index
      %45 = vector.load %arg5[%c0_20, %c0_21] : memref<8x8xf32, #tpu.memory_space<vmem>>, vector<8x8xf32>
      %cst_22 = arith.constant dense<0.000000e+00> : vector<8xf32>
      %46 = vector.multi_reduction <add>, %45, %cst_22 [1] : vector<8x8xf32> to vector<8xf32>
      %47 = vector.shape_cast %46 : vector<8xf32> to vector<8x1xf32>
      %cst_23 = arith.constant 1.000000e-07 : f32
      %48 = vector.broadcast %cst_23 : f32 to vector<8x1xf32>
      %49 = arith.addf %47, %48 : vector<8x1xf32>
      %50 = math.log %49 : vector<8x1xf32>
      %c0_24 = arith.constant 0 : index
      %c0_25 = arith.constant 0 : index
      %51 = vector.load %arg6[%c0_24, %c0_25] : memref<8x1xf32, #tpu.memory_space<vmem>>, vector<8x1xf32>
      %52 = arith.subf %50, %51 : vector<8x1xf32>
      %c0_26 = arith.constant 0 : index
      %c0_27 = arith.constant 0 : index
      %53 = vector.load %arg4[%c0_26, %c0_27] : memref<8x1xf32, #tpu.memory_space<vmem>>, vector<8x1xf32>
      tpu.vector_store %arg4[%c0_26, %c0_27], %52 {strides = array<i32>} : memref<8x1xf32, #tpu.memory_space<vmem>>, vector<8x1xf32>,
    } else {
    }
    return
  }
  func.func @transform_0(%arg0: i32, %arg1: i32) -> (i32, i32) {
    %c0_i32 = arith.constant 0 : i32
    %c0_i32_0 = arith.constant 0 : i32
    return %arg0, %c0_i32 : i32, i32
  }
  func.func @transform_1(%arg0: i32, %arg1: i32) -> (i32, i32) {
    %c0_i32 = arith.constant 0 : i32
    %c0_i32_0 = arith.constant 0 : i32
    return %arg1, %c0_i32 : i32, i32
  }
  func.func @transform_2(%arg0: i32, %arg1: i32) -> (i32, i32) {
    %c0_i32 = arith.constant 0 : i32
    %c0_i32_0 = arith.constant 0 : i32
    return %arg0, %c0_i32 : i32, i32
  }
}

</mosaic_0001>

<llo_original>
// kernel: tpu_custom_call.1
$region0: #{tpu_custom_call.1}
  #allocation0 [shape = 'u32[]', space=smem, size = 0x4, offset = 0x4, fixed_abs, tag = 'smem constant byte address 0x4 - core index']
  #allocation1 [shape = 'u32[144,128]{1,0:T(1,128)}', space=vmem, size = 0x12000, scoped, tag = 'internal scratch']
  #allocation2 [shape = 'f32[8,8]{1,0:T(8,128)}', space=vmem, size = 0x1000, scoped, tag = 'scratch operand']
  #allocation3 [shape = 'f32[8,1]{1,0:T(8,128)}', space=vmem, size = 0x1000, scoped, tag = 'scratch operand']
  %s0 = inlined_call_operand.hbm [shape: f32[8,128], index: 0, kind: input, shape index: {}]
  %s1 = inlined_call_operand.hbm [shape: f32[8,128], index: 1, kind: input, shape index: {}]
  %s2 = inlined_call_operand.vmem [shape: f32[8,1], index: 2, kind: output, shape index: {}]
  %s3 = sld [smem:[#allocation0]]
  $region46: #{tpu_custom_call.1} parent=0
    _
  %s5 = ssub.s32 1, %s3
  %s6 = scalar_select 0, %s5, %s3
  $region1: #{tpu_custom_call.1} parent=0
    #allocation4 [shape = 'u8[4096]{0}', space=vmem, size = 0x1000, scoped, tag = 'input window, operand 0, single buffered']
    #allocation5 [shape = 's32[1]{0}', space=sflag, size = 0x4, scoped, tag = 'scoped memory for tpu_custom_call.1']
    #allocation6 [shape = 'u8[4096]{0}', space=vmem, size = 0x1000, scoped, tag = 'input window, operand 1, single buffered']
    #allocation7 [shape = 's32[1]{0}', space=sflag, size = 0x4, scoped, tag = 'scoped memory for tpu_custom_call.1']
    %7 = vsyncpa [#allocation5], 0
    %8 = vsyncpa [#allocation7], 0
    // Predicated region
    $region2: #{tpu_custom_call.1} parent=1 // pred_check
      _
    $region3: #{tpu_custom_call.1} parent=1 // pred_check_branch
      %10 = sbr.rel (0) target = $region5
    $region4: #{tpu_custom_call.1} parent=1 // pred_region
      %s12 = ssub.s32 128, 128
      %13 = vsyncadd [#allocation5], %s12
      %s15 = sshll.u32 [#allocation4], 4
      %s16 = int_to_ptr.vmem [resolvable:$true] %s15
      %18 = dma.hbm_to_vmem [thread:$0]  %s0, 128, %s16, [#allocation5]
    $region5: #{tpu_custom_call.1} parent=1 // pred_fallthru
      _
    // Predicated region
    $region6: #{tpu_custom_call.1} parent=1 // pred_check
      _
    $region7: #{tpu_custom_call.1} parent=1 // pred_check_branch
      %20 = sbr.rel (0) target = $region9
    $region8: #{tpu_custom_call.1} parent=1 // pred_region
      %s22 = ssub.s32 128, 128
      %23 = vsyncadd [#allocation7], %s22
      %s25 = sshll.u32 [#allocation6], 4
      %s26 = int_to_ptr.vmem [resolvable:$true] %s25
      %28 = dma.hbm_to_vmem [thread:$0]  %s1, 128, %s26, [#allocation7]
    $region9: #{tpu_custom_call.1} parent=1 // pred_fallthru
      _
    // Predicated region
    $region10: #{tpu_custom_call.1} parent=1 // pred_check
      _
    $region11: #{tpu_custom_call.1} parent=1 // pred_check_branch
      %30 = sbr.rel (0) target = $region13
    $region12: #{tpu_custom_call.1} parent=1 // pred_region
      %31 = dma.done [#allocation5], 128
    $region13: #{tpu_custom_call.1} parent=1 // pred_fallthru
      _
    // Predicated region
    $region14: #{tpu_custom_call.1} parent=1 // pred_check
      _
    $region15: #{tpu_custom_call.1} parent=1 // pred_check_branch
      %33 = sbr.rel (0) target = $region17
    $region16: #{tpu_custom_call.1} parent=1 // pred_region
      %34 = dma.done [#allocation7], 128
    $region17: #{tpu_custom_call.1} parent=1 // pred_fallthru
      _
    %s35 = smul.u32 0, 8
    %s36 = smul.u32 0, 8
    %p37 = scmp.eq.s32.totalorder 0, 0
    // Predicated region
    $region18: #{tpu_custom_call.1} parent=1 // pred_check
      %p38 = pneg %p37
    $region19: #{tpu_custom_call.1} parent=1 // pred_check_branch
      %40 = sbr.rel (%p38) target = $region21
    $region20: #{tpu_custom_call.1} parent=1 // pred_region
      %vm41 = vcmask 64512
      %42 = vst.msk [vmem:[#allocation2] sm:$0xff] %vm41, 0.0
      %vm43 = vcmask 7168
      %44 = vst.msk [vmem:[#allocation3] sm:$0xff] %vm43, 0.0
    $region21: #{tpu_custom_call.1} parent=1 // pred_fallthru
      _
    %v45 = vld [vmem:[#allocation4] sm:$0xff]
    %v46 = vld [vmem:[#allocation6] sm:$0xff]
    %v47 = vmul.f32 %v45, 14.285714
    %48 = vmatprep.subr.mxu0 0.0
    %49 = vmatpush1.xpose.msra.mxu0 0.0
    %50 = vmatprep.subr.mxu0 0.0
    %51 = vmatpush1.xpose.msra.mxu0 0.0
    %52 = vmatprep.subr.mxu0 0.0
    %53 = vmatpush1.xpose.msra.mxu0 0.0
    %54 = vmatprep.subr.mxu0 0.0
    %55 = vmatpush1.xpose.msra.mxu0 0.0
    %56 = vmatprep.subr.mxu0 0.0
    %57 = vmatpush1.xpose.msra.mxu0 0.0
    %58 = vmatprep.subr.mxu0 0.0
    %59 = vmatpush1.xpose.msra.mxu0 0.0
    %60 = vmatprep.subr.mxu0 0.0
    %61 = vmatpush1.xpose.msra.mxu0 0.0
    %62 = vmatprep.subr.mxu0 0.0
    %63 = vmatpush1.xpose.msra.mxu0 0.0
    %64 = vmatprep.subr.mxu0 0.0
    %65 = vmatpush1.xpose.msra.mxu0 0.0
    %66 = vmatprep.subr.mxu0 0.0
    %67 = vmatpush1.xpose.msra.mxu0 0.0
    %68 = vmatprep.subr.mxu0 0.0
    %69 = vmatpush1.xpose.msra.mxu0 0.0
    %70 = vmatprep.subr.mxu0 0.0
    %71 = vmatpush1.xpose.msra.mxu0 0.0
    %72 = vmatprep.subr.mxu0 0.0
    %73 = vmatpush1.xpose.msra.mxu0 0.0
    %74 = vmatprep.subr.mxu0 0.0
    %75 = vmatpush1.xpose.msra.mxu0 0.0
    %76 = vmatprep.subr.mxu0 0.0
    %77 = vmatpush1.xpose.msra.mxu0 0.0
    %78 = vmatprep.subr.mxu0 0.0
    %79 = vmatpush1.xpose.msra.mxu0 %v46
    %80 = vmatprep.subr.mxu0 0.0
    %81 = vmatpush2.xpose.msra.mxu0 0.0
    %82 = vmatprep.subr.mxu0 0.0
    %83 = vmatpush2.xpose.msra.mxu0 0.0
    %84 = vmatprep.subr.mxu0 0.0
    %85 = vmatpush2.xpose.msra.mxu0 0.0
    %86 = vmatprep.subr.mxu0 0.0
    %87 = vmatpush2.xpose.msra.mxu0 0.0
    %88 = vmatprep.subr.mxu0 0.0
    %89 = vmatpush2.xpose.msra.mxu0 0.0
    %90 = vmatprep.subr.mxu0 0.0
    %91 = vmatpush2.xpose.msra.mxu0 0.0
    %92 = vmatprep.subr.mxu0 0.0
    %93 = vmatpush2.xpose.msra.mxu0 0.0
    %94 = vmatprep.subr.mxu0 0.0
    %95 = vmatpush2.xpose.msra.mxu0 0.0
    %96 = vmatprep.subr.mxu0 0.0
    %97 = vmatpush2.xpose.msra.mxu0 0.0
    %98 = vmatprep.subr.mxu0 0.0
    %99 = vmatpush2.xpose.msra.mxu0 0.0
    %100 = vmatprep.subr.mxu0 0.0
    %101 = vmatpush2.xpose.msra.mxu0 0.0
    %102 = vmatprep.subr.mxu0 0.0
    %103 = vmatpush2.xpose.msra.mxu0 0.0
    %104 = vmatprep.subr.mxu0 0.0
    %105 = vmatpush2.xpose.msra.mxu0 0.0
    %106 = vmatprep.subr.mxu0 0.0
    %107 = vmatpush2.xpose.msra.mxu0 0.0
    %108 = vmatprep.subr.mxu0 0.0
    %109 = vmatpush2.xpose.msra.mxu0 0.0
    %110 = vmatprep.subr.mxu0 0.0
    %111 = vmatpush2.xpose.msra.mxu0 0.0
    %112 = vmatprep.mubr.f32.mxu0 0.0
    %113 = vmatmul.mubr.f32.gmra.mxu0 %v47
    %v114 = vpop.f32.mrf.mxu0
    %v115 = vadd.f32 0.0, %v114
    %v116 = vpop.f32.mrf.mxu0
    %117 = vdwg.mxu0
    %v118 = vmul.f32 %v115, 1.442695
    %v119 = vpow.pop %v118
    %s120 = sadd.s32 %s36, 8
    %p121 = scmp.lt.s32.totalorder %s35, %s120
    %s122 = sadd.s32 %s35, 8
    %p123 = scmp.lt.s32.totalorder %s36, %s122
    %p124 = pnand %p121, %p123
    %p125 = pneg %p124
    // Predicated region
    $region22: #{tpu_custom_call.1} parent=1 // pred_check
      _
    $region23: #{tpu_custom_call.1} parent=1 // pred_check_branch
      %127 = sbr.rel (%p124) target = $region25
    $region24: #{tpu_custom_call.1} parent=1 // pred_region
      %v128 = vlaneseq
      %v129 = vshrl.u32 %v128, 7
      %v130 = vstv %s35
      %v131 = vadd.s32 %v130, %v129
      %v132 = vlaneseq
      %v133 = vand.u32 %v132, 127
      %v134 = vstv %s36
      %v135 = vadd.s32 %v134, %v133
      %vm136 = vcmp.eq.s32.totalorder %v131, %v135
      %v137 = vsel %vm136, 0.0, %v119
      %v138 = vld [vmem:[#allocation2] sm:$0xff]
      %v139 = vadd.f32 %v138, %v137
      %vm140 = vcmask 64512
      %141 = vst.msk [vmem:[#allocation2] sm:$0xff] %vm140, %v139
    $region25: #{tpu_custom_call.1} parent=1 // pred_fallthru
      _
    %p142 = pneg %p125
    // Predicated region
    $region26: #{tpu_custom_call.1} parent=1 // pred_check
      _
    $region27: #{tpu_custom_call.1} parent=1 // pred_check_branch
      %144 = sbr.rel (%p125) target = $region29
    $region28: #{tpu_custom_call.1} parent=1 // pred_region
      %v145 = vld [vmem:[#allocation2] sm:$0xff]
      %v146 = vadd.f32 %v145, %v119
      %vm147 = vcmask 64512
      %148 = vst.msk [vmem:[#allocation2] sm:$0xff] %vm147, %v146
    $region29: #{tpu_custom_call.1} parent=1 // pred_fallthru
      _
    %s149 = sadd.s32 %s35, 4
    %p150 = scmp.lt.s32.totalorder %s122, 4
    %s151 = scalar_select %p150, %s122, 4
    %s152 = sadd.s32 %s151, 4
    %p153 = scmp.gt.s32.totalorder %s35, 4
    %s154 = scalar_select %p153, %s35, 4
    %s155 = ssub.s32 %s154, 4
    %p156 = scmp.lt.s32.totalorder %s149, %s152
    %p157 = scmp.lt.s32.totalorder %s149, %s120
    %p158 = scmp.lt.s32.totalorder %s36, %s152
    %p159 = pnand %p157, %p158
    %p160 = pneg %p159
    %p161 = pnand %p156, %p160
    %p162 = pneg %p161
    %p163 = scmp.lt.s32.totalorder %s155, %s149
    %p164 = scmp.lt.s32.totalorder %s155, %s120
    %p165 = scmp.lt.s32.totalorder %s36, %s149
    %p166 = pnand %p164, %p165
    %p167 = pneg %p166
    %p168 = pnand %p163, %p167
    %p169 = pneg %p168
    %p170 = por %p162, %p169
    // Predicated region
    $region30: #{tpu_custom_call.1} parent=1 // pred_check
      %p171 = pneg %p170
    $region31: #{tpu_custom_call.1} parent=1 // pred_check_branch
      %173 = sbr.rel (%p171) target = $region33
    $region32: #{tpu_custom_call.1} parent=1 // pred_region
      %v174 = vlaneseq
      %v175 = vshrl.u32 %v174, 7
      %v176 = vstv %s35
      %v177 = vadd.s32 %v176, %v175
      %v178 = vlaneseq
      %v179 = vand.u32 %v178, 127
      %v180 = vstv %s36
      %v181 = vadd.s32 %v180, %v179
      %vm182 = vcmp.lt.s32.totalorder %v177, 4
      %v183 = vadd.s32 %v177, 4
      %v184 = vsub.s32 %v177, 4
      %v185 = vsel %vm182, %v183, %v184
      %v186 = vld [vmem:[#allocation3] sm:$0xff]
      %vm187 = vcmp.eq.s32.totalorder %v181, %v185
      %v188 = vsel %vm187, %v115, 0.0
      %vm189 = vcmask 64512
      %v190 = vsel %vm189, %v188, 0.0
      %191 = vadd.xlane.f32.xlu0 %v190
      %v192 = vpop.xlane.xlu0 %191
      %v193 = vadd.f32 %v186, %v192
      %vm194 = vcmask 7168
      %195 = vst.msk [vmem:[#allocation3] sm:$0xff] %vm194, %v193
    $region33: #{tpu_custom_call.1} parent=1 // pred_fallthru
      _
    // Predicated region
    $region34: #{tpu_custom_call.1} parent=1 // pred_check
      %p196 = pneg %p37
    $region35: #{tpu_custom_call.1} parent=1 // pred_check_branch
      %198 = sbr.rel (%p196) target = $region37
    $region36: #{tpu_custom_call.1} parent=1 // pred_region
      %v199 = vld [vmem:[#allocation2] sm:$0xff]
      %vm200 = vcmask 64512
      %v201 = vsel %vm200, %v199, 0.0
      %202 = vadd.xlane.f32.xlu0 %v201
      %v203 = vpop.xlane.xlu0 %202
      %v204 = vadd.f32 %v203, 1e-07
      %v205 = vlog2.pop %v204
      %v206 = vmul.f32 %v205, 0.6931472
      %v207 = vld [vmem:[#allocation3] sm:$0xff]
      %v208 = vsub.f32 %v206, %v207
      %vm209 = vcmask 7168
      %210 = vst.msk [vmem:[%s2] sm:$0xff] %vm209, %v208
    $region37: #{tpu_custom_call.1} parent=1 // pred_fallthru
      _
    // Predicated region
    $region38: #{tpu_custom_call.1} parent=1 // pred_check
      _
    $region39: #{tpu_custom_call.1} parent=1 // pred_check_branch
      %212 = sbr.rel (0) target = $region41
    $region40: #{tpu_custom_call.1} parent=1 // pred_region
      _
    $region41: #{tpu_custom_call.1} parent=1 // pred_fallthru
      _
    // Predicated region
    $region42: #{tpu_custom_call.1} parent=1 // pred_check
      _
    $region43: #{tpu_custom_call.1} parent=1 // pred_check_branch
      %214 = sbr.rel (0) target = $region45
    $region44: #{tpu_custom_call.1} parent=1 // pred_region
      _
    $region45: #{tpu_custom_call.1} parent=1 // pred_fallthru
      _
    %215 = vsyncpa [#allocation5], 1
    %216 = vsyncpa [#allocation7], 1

</llo_original>
